<compile_context>
chip_gen: v7x
topology: tpu7x:2x2x1
jax: 0.10.0
libtpu: 0.0.40
codegen_flags: <defaults>
</compile_context>

<pallas_src>
import functools

import jax
import jax.numpy as jnp
from jax.experimental import pallas as pl
from jax.experimental.pallas import tpu as pltpu

TN = 128        # lane tile (vreg lane width)
MAX_TM = 1024   # max sublane rows per grid step (~512 KiB per f32 input block)


def _dice_partials_kernel(p_ref, t_ref, out_ref, inter_acc, den_acc, *,
                          tm, rows, blocks_per_shard, needs_mask):
    s = pl.program_id(0)   # shard axis ("parallel" -> megacore split on v7x)
    i = pl.program_id(1)   # streaming/reduction axis ("arbitrary")

    @pl.when(i == 0)
    def _():
        inter_acc[...] = jnp.zeros_like(inter_acc)
        den_acc[...] = jnp.zeros_like(den_acc)

    # Native-dtype DMA; cast to f32 in-kernel (VPU).
    p = p_ref[...].astype(jnp.float32)
    t = t_ref[...].astype(jnp.float32)

    if needs_mask:
        # Logical (unclamped) block id; rows past `rows` (overhanging tail or
        # fully out-of-range shard blocks) contribute exactly zero.
        gb = s * blocks_per_shard + i
        row_ids = gb * tm + jax.lax.broadcasted_iota(jnp.int32, (tm, TN), 0)
        mask = row_ids < rows
        p = jnp.where(mask, p, 0.0)
        t = jnp.where(mask, t, 0.0)

    # Whole-vreg elementwise accumulation (VPU); no per-step cross-lane work.
    inter_acc[...] += p * t
    den_acc[...] += p + t

    @pl.when(i == blocks_per_shard - 1)
    def _():
        # Single epilogue reduction per shard (XLU), written to SMEM scalars.
        out_ref[0, 0] = jnp.sum(inter_acc[...])
        out_ref[0, 1] = jnp.sum(den_acc[...])


def dice_loss(predictions, targets, smooth=1e-6):
    """Pallas TPU implementation of DiceLoss.forward (returns scalar f32)."""
    p_flat = jnp.ravel(predictions)
    t_flat = jnp.ravel(targets)
    n = p_flat.shape[0]

    # Zero-pad only when not lane-aligned (zeros are neutral for all sums).
    if n % TN:
        pad = TN - (n % TN)
        p_flat = jnp.pad(p_flat, (0, pad))
        t_flat = jnp.pad(t_flat, (0, pad))
    rows = p_flat.shape[0] // TN
    p2 = p_flat.reshape(rows, TN)
    t2 = t_flat.reshape(rows, TN)

    # Tile: single full-array block when small, else MAX_TM-row tiles.
    tm = rows if rows <= MAX_TM else MAX_TM
    num_blocks = pl.cdiv(rows, tm)
    # Use the second TensorCore (v7x) only when there is >1 block of work.
    num_shards = 2 if num_blocks > 1 else 1
    bps = pl.cdiv(num_blocks, num_shards)          # blocks per shard
    needs_mask = (num_shards * bps * tm) != rows   # any ragged/extra blocks?

    kernel = functools.partial(
        _dice_partials_kernel,
        tm=tm, rows=rows, blocks_per_shard=bps, needs_mask=needs_mask)

    def in_map(s, i):
        # Clamp so the DMA source is always in-bounds; the kernel masks rows
        # belonging to logically out-of-range blocks to zero.
        return (jnp.minimum(s * bps + i, num_blocks - 1), 0)

    partials = pl.pallas_call(
        kernel,
        out_shape=jax.ShapeDtypeStruct((num_shards, 2), jnp.float32),
        grid_spec=pltpu.PrefetchScalarGridSpec(
            num_scalar_prefetch=0,
            grid=(num_shards, bps),
            in_specs=[
                pl.BlockSpec((tm, TN), in_map),
                pl.BlockSpec((tm, TN), in_map),
            ],
            out_specs=pl.BlockSpec((1, 2), lambda s, i: (s, 0),
                                   memory_space=pltpu.SMEM),
            scratch_shapes=[
                pltpu.VMEM((tm, TN), jnp.float32),   # sum(p * t) accumulator
                pltpu.VMEM((tm, TN), jnp.float32),   # sum(p + t) accumulator
            ],
        ),
        compiler_params=pltpu.CompilerParams(
            dimension_semantics=("parallel", "arbitrary"),
        ),
    )(p2, t2)

    intersection = jnp.sum(partials[:, 0])
    denom_sum = jnp.sum(partials[:, 1])            # == sum(p) + sum(t)
    dice = (2.0 * intersection + smooth) / (denom_sum + smooth)
    return 1.0 - dice


def dice_loss_ref(predictions, targets, smooth=1e-6):
    p = jnp.ravel(predictions).astype(jnp.float32)
    t = jnp.ravel(targets).astype(jnp.float32)
    intersection = jnp.sum(p * t)
    dice = (2.0 * intersection + smooth) / (jnp.sum(p) + jnp.sum(t) + smooth)
    return 1.0 - dice


if __name__ == "__main__":
    key = jax.random.PRNGKey(0)
    kp, kt = jax.random.split(key)
    # Module-consistent small shapes: sigmoid probabilities vs binary masks.
    preds = jax.nn.sigmoid(jax.random.normal(kp, (2, 4, 16, 16), jnp.float32))
    targs = (jax.random.uniform(kt, (2, 4, 16, 16)) > 0.5).astype(jnp.float32)

    loss = jax.block_until_ready(dice_loss(preds, targs))
    ref = jax.block_until_ready(dice_loss_ref(preds, targs))

    assert jnp.allclose(loss, ref, atol=1e-5, rtol=1e-5), (loss, ref)
    print("KERNEL_OK")
</pallas_src>

<mosaic_0001>
module attributes {stable_mosaic.version = 11 : i64} {
  func.func @_dice_partials_kernel(%arg0: i32, %arg1: i32, %arg2: memref<16x128xf32, #tpu.memory_space<vmem>>, %arg3: memref<16x128xf32, #tpu.memory_space<vmem>>, %arg4: memref<1x2xf32, #tpu.memory_space<smem>>, %arg5: memref<16x128xf32, #tpu.memory_space<vmem>>, %arg6: memref<16x128xf32, #tpu.memory_space<vmem>>) attributes {dimension_semantics = [#tpu.dimension_semantics<parallel>, #tpu.dimension_semantics<arbitrary>], iteration_bounds = array<i64: 1, 1>, scalar_prefetch = 0 : i64, scratch_operands = 2 : i64, tpu.core_type = #tpu.core_type<tc>, window_params = [{transform_indices = @transform_0, window_bounds = array<i64: 16, 128>}, {transform_indices = @transform_1, window_bounds = array<i64: 16, 128>}, {transform_indices = @transform_2, window_bounds = array<i64: 1, 2>}]} {
    %c0_i32 = arith.constant 0 : i32
    %0 = arith.cmpi eq, %arg1, %c0_i32 : i32
    %1 = arith.extui %0 : i1 to i32
    %c0_i32_0 = arith.constant 0 : i32
    %2 = arith.cmpi ne, %1, %c0_i32_0 : i32
    scf.if %2 {
      %cst = arith.constant 0.000000e+00 : f32
      %16 = vector.broadcast %cst : f32 to vector<16x128xf32>
      %c0_14 = arith.constant 0 : index
      %c0_15 = arith.constant 0 : index
      %17 = vector.load %arg5[%c0_14, %c0_15] : memref<16x128xf32, #tpu.memory_space<vmem>>, vector<16x128xf32>
      tpu.vector_store %arg5[%c0_14, %c0_15], %16 {strides = array<i32>} : memref<16x128xf32, #tpu.memory_space<vmem>>, vector<16x128xf32>,
      %cst_16 = arith.constant 0.000000e+00 : f32
      %18 = vector.broadcast %cst_16 : f32 to vector<16x128xf32>
      %c0_17 = arith.constant 0 : index
      %c0_18 = arith.constant 0 : index
      %19 = vector.load %arg6[%c0_17, %c0_18] : memref<16x128xf32, #tpu.memory_space<vmem>>, vector<16x128xf32>
      tpu.vector_store %arg6[%c0_17, %c0_18], %18 {strides = array<i32>} : memref<16x128xf32, #tpu.memory_space<vmem>>, vector<16x128xf32>,
    } else {
    }
    %c0 = arith.constant 0 : index
    %c0_1 = arith.constant 0 : index
    %3 = vector.load %arg2[%c0, %c0_1] : memref<16x128xf32, #tpu.memory_space<vmem>>, vector<16x128xf32>
    %c0_2 = arith.constant 0 : index
    %c0_3 = arith.constant 0 : index
    %4 = vector.load %arg3[%c0_2, %c0_3] : memref<16x128xf32, #tpu.memory_space<vmem>>, vector<16x128xf32>
    %c0_4 = arith.constant 0 : index
    %c0_5 = arith.constant 0 : index
    %5 = vector.load %arg5[%c0_4, %c0_5] : memref<16x128xf32, #tpu.memory_space<vmem>>, vector<16x128xf32>
    %6 = arith.mulf %3, %4 : vector<16x128xf32>
    %7 = arith.addf %5, %6 : vector<16x128xf32>
    %c0_6 = arith.constant 0 : index
    %c0_7 = arith.constant 0 : index
    %8 = vector.load %arg5[%c0_6, %c0_7] : memref<16x128xf32, #tpu.memory_space<vmem>>, vector<16x128xf32>
    tpu.vector_store %arg5[%c0_6, %c0_7], %7 {strides = array<i32>} : memref<16x128xf32, #tpu.memory_space<vmem>>, vector<16x128xf32>,
    %c0_8 = arith.constant 0 : index
    %c0_9 = arith.constant 0 : index
    %9 = vector.load %arg6[%c0_8, %c0_9] : memref<16x128xf32, #tpu.memory_space<vmem>>, vector<16x128xf32>
    %10 = arith.addf %3, %4 : vector<16x128xf32>
    %11 = arith.addf %9, %10 : vector<16x128xf32>
    %c0_10 = arith.constant 0 : index
    %c0_11 = arith.constant 0 : index
    %12 = vector.load %arg6[%c0_10, %c0_11] : memref<16x128xf32, #tpu.memory_space<vmem>>, vector<16x128xf32>
    tpu.vector_store %arg6[%c0_10, %c0_11], %11 {strides = array<i32>} : memref<16x128xf32, #tpu.memory_space<vmem>>, vector<16x128xf32>,
    %c0_i32_12 = arith.constant 0 : i32
    %13 = arith.cmpi eq, %arg1, %c0_i32_12 : i32
    %14 = arith.extui %13 : i1 to i32
    %c0_i32_13 = arith.constant 0 : i32
    %15 = arith.cmpi ne, %14, %c0_i32_13 : i32
    scf.if %15 {
      %c0_14 = arith.constant 0 : index
      %c0_15 = arith.constant 0 : index
      %16 = vector.load %arg5[%c0_14, %c0_15] : memref<16x128xf32, #tpu.memory_space<vmem>>, vector<16x128xf32>
      %17 = vector.shape_cast %16 : vector<16x128xf32> to vector<1x16x128xf32>
      %cst = arith.constant dense<0.000000e+00> : vector<1xf32>
      %18 = vector.multi_reduction <add>, %17, %cst [1, 2] : vector<1x16x128xf32> to vector<1xf32>
      %19 = vector.shape_cast %18 : vector<1xf32> to vector<1x1x1xf32>
      %20 = vector.extract %19[0, 0, 0] : f32 from vector<1x1x1xf32>
      %c0_16 = arith.constant 0 : index
      %c0_17 = arith.constant 0 : index
      %21 = memref.load %arg4[%c0_16, %c0_17] : memref<1x2xf32, #tpu.memory_space<smem>>
      memref.store %20, %arg4[%c0_16, %c0_17] : memref<1x2xf32, #tpu.memory_space<smem>>
      %c0_18 = arith.constant 0 : index
      %c0_19 = arith.constant 0 : index
      %22 = vector.load %arg6[%c0_18, %c0_19] : memref<16x128xf32, #tpu.memory_space<vmem>>, vector<16x128xf32>
      %23 = vector.shape_cast %22 : vector<16x128xf32> to vector<1x16x128xf32>
      %cst_20 = arith.constant dense<0.000000e+00> : vector<1xf32>
      %24 = vector.multi_reduction <add>, %23, %cst_20 [1, 2] : vector<1x16x128xf32> to vector<1xf32>
      %25 = vector.shape_cast %24 : vector<1xf32> to vector<1x1x1xf32>
      %26 = vector.extract %25[0, 0, 0] : f32 from vector<1x1x1xf32>
      %c0_21 = arith.constant 0 : index
      %c1 = arith.constant 1 : index
      %27 = memref.load %arg4[%c0_21, %c1] : memref<1x2xf32, #tpu.memory_space<smem>>
      memref.store %26, %arg4[%c0_21, %c1] : memref<1x2xf32, #tpu.memory_space<smem>>
    } else {
    }
    return
  }
  func.func @transform_0(%arg0: i32, %arg1: i32) -> (i32, i32) {
    %c1_i32 = arith.constant 1 : i32
    %0 = arith.muli %arg0, %c1_i32 : i32
    %1 = arith.addi %0, %arg1 : i32
    %c0_i32 = arith.constant 0 : i32
    %2 = arith.minsi %1, %c0_i32 : i32
    %c0_i32_0 = arith.constant 0 : i32
    %c0_i32_1 = arith.constant 0 : i32
    return %2, %c0_i32_0 : i32, i32
  }
  func.func @transform_1(%arg0: i32, %arg1: i32) -> (i32, i32) {
    %c1_i32 = arith.constant 1 : i32
    %0 = arith.muli %arg0, %c1_i32 : i32
    %1 = arith.addi %0, %arg1 : i32
    %c0_i32 = arith.constant 0 : i32
    %2 = arith.minsi %1, %c0_i32 : i32
    %c0_i32_0 = arith.constant 0 : i32
    %c0_i32_1 = arith.constant 0 : i32
    return %2, %c0_i32_0 : i32, i32
  }
  func.func @transform_2(%arg0: i32, %arg1: i32) -> (i32, i32) {
    %c0_i32 = arith.constant 0 : i32
    %c0_i32_0 = arith.constant 0 : i32
    return %arg0, %c0_i32 : i32, i32
  }
}

</mosaic_0001>

<llo_original>
// kernel: tpu_custom_call.1
$region0: #{tpu_custom_call.1}
  #allocation0 [shape = 'u32[]', space=smem, size = 0x4, offset = 0x4, fixed_abs, tag = 'smem constant byte address 0x4 - core index']
  #allocation1 [shape = 'u32[144,128]{1,0:T(1,128)}', space=vmem, size = 0x12000, scoped, tag = 'internal scratch']
  #allocation2 [shape = 'f32[16,128]{1,0:T(8,128)}', space=vmem, size = 0x2000, scoped, tag = 'scratch operand']
  #allocation3 [shape = 'f32[16,128]{1,0:T(8,128)}', space=vmem, size = 0x2000, scoped, tag = 'scratch operand']
  %s0 = inlined_call_operand.hbm [shape: f32[16,128], index: 0, kind: input, shape index: {}]
  %s1 = inlined_call_operand.hbm [shape: f32[16,128], index: 1, kind: input, shape index: {}]
  %s2 = inlined_call_operand.hbm [shape: f32[1,2], index: 2, kind: output, shape index: {}]
  %s3 = sld [smem:[#allocation0]]
  $region34: #{tpu_custom_call.1} parent=0
    _
  %s5 = ssub.s32 1, %s3
  %s6 = scalar_select 0, %s5, %s3
  $region1: #{tpu_custom_call.1} parent=0
    #allocation4 [shape = 'u8[8192]{0}', space=vmem, size = 0x2000, scoped, tag = 'input window, operand 0, single buffered']
    #allocation5 [shape = 's32[1]{0}', space=sflag, size = 0x4, scoped, tag = 'scoped memory for tpu_custom_call.1']
    #allocation6 [shape = 's32[1]{0}', space=sflag, size = 0x4, scoped, tag = 'scoped memory for tpu_custom_call.1']
    #allocation7 [shape = 'u8[8192]{0}', space=vmem, size = 0x2000, scoped, tag = 'input window, operand 1, single buffered']
    #allocation8 [shape = 's32[1]{0}', space=sflag, size = 0x4, scoped, tag = 'scoped memory for tpu_custom_call.1']
    #allocation9 [shape = 'u8[512]{0}', space=smem, size = 0x200, scoped, tag = 'output window, operand 0, single buffered']
    %7 = vsyncpa [#allocation5], 0
    %8 = vsyncpa [#allocation8], 0
    %9 = vsyncpa [#allocation6], 0
    // Predicated region
    $region2: #{tpu_custom_call.1} parent=1 // pred_check
      _
    $region3: #{tpu_custom_call.1} parent=1 // pred_check_branch
      %11 = sbr.rel (0) target = $region5
    $region4: #{tpu_custom_call.1} parent=1 // pred_region
      %s12 = sadd.s32 0, 0
      %p13 = scmp.lt.s32.totalorder %s12, 0
      %s14 = scalar_select %p13, %s12, 0
      %s15 = smul.u32 2, %s14
      %s17 = ssub.s32 256, 256
      %18 = vsyncadd [#allocation5], %s17
      %s19 = smul.addr %s15, 128
      %s20 = scalar_lea.hbm %s0, %s19
      %s21 = sshll.u32 [#allocation4], 4
      %s22 = int_to_ptr.vmem [resolvable:$true] %s21
      %27 = dma.hbm_to_vmem [thread:$0]  %s20, 256, %s22, [#allocation5], 128, 128, 8
    $region5: #{tpu_custom_call.1} parent=1 // pred_fallthru
      _
    // Predicated region
    $region6: #{tpu_custom_call.1} parent=1 // pred_check
      _
    $region7: #{tpu_custom_call.1} parent=1 // pred_check_branch
      %29 = sbr.rel (0) target = $region9
    $region8: #{tpu_custom_call.1} parent=1 // pred_region
      %s30 = sadd.s32 0, 0
      %p31 = scmp.lt.s32.totalorder %s30, 0
      %s32 = scalar_select %p31, %s30, 0
      %s33 = smul.u32 2, %s32
      %s35 = ssub.s32 256, 256
      %36 = vsyncadd [#allocation8], %s35
      %s37 = smul.addr %s33, 128
      %s38 = scalar_lea.hbm %s1, %s37
      %s39 = sshll.u32 [#allocation7], 4
      %s40 = int_to_ptr.vmem [resolvable:$true] %s39
      %45 = dma.hbm_to_vmem [thread:$0]  %s38, 256, %s40, [#allocation8], 128, 128, 8
    $region9: #{tpu_custom_call.1} parent=1 // pred_fallthru
      _
    // Predicated region
    $region10: #{tpu_custom_call.1} parent=1 // pred_check
      _
    $region11: #{tpu_custom_call.1} parent=1 // pred_check_branch
      %47 = sbr.rel (0) target = $region13
    $region12: #{tpu_custom_call.1} parent=1 // pred_region
      %48 = dma.done [#allocation5], 256
    $region13: #{tpu_custom_call.1} parent=1 // pred_fallthru
      _
    // Predicated region
    $region14: #{tpu_custom_call.1} parent=1 // pred_check
      _
    $region15: #{tpu_custom_call.1} parent=1 // pred_check_branch
      %50 = sbr.rel (0) target = $region17
    $region16: #{tpu_custom_call.1} parent=1 // pred_region
      %51 = dma.done [#allocation8], 256
    $region17: #{tpu_custom_call.1} parent=1 // pred_fallthru
      _
    %s52 = sadd.s32 0, 0
    %p53 = scmp.lt.s32.totalorder %s52, 0
    %s54 = scalar_select %p53, %s52, 0
    %s55 = smul.u32 2, %s54
    %s56 = sadd.s32 0, 0
    %p57 = scmp.lt.s32.totalorder %s56, 0
    %s58 = scalar_select %p57, %s56, 0
    %s59 = smul.u32 2, %s58
    %p60 = scmp.eq.s32.totalorder 0, 0
    // Predicated region
    $region18: #{tpu_custom_call.1} parent=1 // pred_check
      %p61 = pneg %p60
    $region19: #{tpu_custom_call.1} parent=1 // pred_check_branch
      %63 = sbr.rel (%p61) target = $region21
    $region20: #{tpu_custom_call.1} parent=1 // pred_region
      %64 = vst [vmem:[#allocation2] sm:$0xff] 0.0
      %65 = vst [vmem:[#allocation2 + $0x8] sm:$0xff] 0.0
      %66 = vst [vmem:[#allocation3] sm:$0xff] 0.0
      %67 = vst [vmem:[#allocation3 + $0x8] sm:$0xff] 0.0
    $region21: #{tpu_custom_call.1} parent=1 // pred_fallthru
      _
    %v68 = vld [vmem:[#allocation4] sm:$0xff]
    %v69 = vld [vmem:[#allocation4 + $0x8] sm:$0xff]
    %v70 = vld [vmem:[#allocation7] sm:$0xff]
    %v71 = vld [vmem:[#allocation7 + $0x8] sm:$0xff]
    %v72 = vld [vmem:[#allocation2] sm:$0xff]
    %v73 = vld [vmem:[#allocation2 + $0x8] sm:$0xff]
    %v74 = vmul.f32 %v68, %v70
    %v75 = vmul.f32 %v69, %v71
    %v76 = vadd.f32 %v72, %v74
    %v77 = vadd.f32 %v73, %v75
    %78 = vst [vmem:[#allocation2] sm:$0xff] %v76
    %79 = vst [vmem:[#allocation2 + $0x8] sm:$0xff] %v77
    %v80 = vld [vmem:[#allocation3] sm:$0xff]
    %v81 = vld [vmem:[#allocation3 + $0x8] sm:$0xff]
    %v82 = vadd.f32 %v68, %v70
    %v83 = vadd.f32 %v69, %v71
    %v84 = vadd.f32 %v80, %v82
    %v85 = vadd.f32 %v81, %v83
    %86 = vst [vmem:[#allocation3] sm:$0xff] %v84
    %87 = vst [vmem:[#allocation3 + $0x8] sm:$0xff] %v85
    // Predicated region
    $region22: #{tpu_custom_call.1} parent=1 // pred_check
      %p88 = pneg %p60
    $region23: #{tpu_custom_call.1} parent=1 // pred_check_branch
      %90 = sbr.rel (%p88) target = $region25
    $region24: #{tpu_custom_call.1} parent=1 // pred_region
      %v91 = vld [vmem:[#allocation2] sm:$0xff]
      %v92 = vld [vmem:[#allocation2 + $0x8] sm:$0xff]
      %v93 = vadd.f32 %v91, %v92
      %94 = vadd.xlane.f32.xlu0 %v93
      %v95 = vpop.xlane.xlu0 %94
      %v96 = vrot.slane %v95, 4
      %v97 = vadd.f32 %v95, %v96
      %v98 = vrot.slane %v97, 2
      %v99 = vadd.f32 %v97, %v98
      %v100 = vrot.slane %v99, 1
      %v101 = vadd.f32 %v99, %v100
      %s102 = vtos %v101
      %s103 = scalar_lea.smem [#allocation9], 0
      %104 = sst [smem:[%s103]] %s102
      %v105 = vld [vmem:[#allocation3] sm:$0xff]
      %v106 = vld [vmem:[#allocation3 + $0x8] sm:$0xff]
      %v107 = vadd.f32 %v105, %v106
      %108 = vadd.xlane.f32.xlu0 %v107
      %v109 = vpop.xlane.xlu0 %108
      %v110 = vrot.slane %v109, 4
      %v111 = vadd.f32 %v109, %v110
      %v112 = vrot.slane %v111, 2
      %v113 = vadd.f32 %v111, %v112
      %v114 = vrot.slane %v113, 1
      %v115 = vadd.f32 %v113, %v114
      %s116 = vtos %v115
      %s117 = scalar_lea.smem [#allocation9], 1
      %118 = sst [smem:[%s117]] %s116
    $region25: #{tpu_custom_call.1} parent=1 // pred_fallthru
      _
    // Predicated region
    $region26: #{tpu_custom_call.1} parent=1 // pred_check
      _
    $region27: #{tpu_custom_call.1} parent=1 // pred_check_branch
      %120 = sbr.rel (0) target = $region29
    $region28: #{tpu_custom_call.1} parent=1 // pred_region
      %s122 = ssub.s32 16, 16
      %123 = vsyncadd [#allocation6], %s122
      %126 = dma.smem_to_hbm [#allocation9], 16, %s2, [#allocation6]
    $region29: #{tpu_custom_call.1} parent=1 // pred_fallthru
      _
    // Predicated region
    $region30: #{tpu_custom_call.1} parent=1 // pred_check
      _
    $region31: #{tpu_custom_call.1} parent=1 // pred_check_branch
      %128 = sbr.rel (0) target = $region33
    $region32: #{tpu_custom_call.1} parent=1 // pred_region
      %129 = dma.done [#allocation6], 16
    $region33: #{tpu_custom_call.1} parent=1 // pred_fallthru
      _
    %130 = sfence
    %131 = vsyncpa [#allocation5], 1
    %132 = vsyncpa [#allocation8], 1
    %133 = vsyncpa [#allocation6], 1

</llo_original>
